<compile_context>
chip_gen: v6e
topology: v6e:2x2x1
jax: 0.10.0
libtpu: 0.0.40
codegen_flags: <defaults>
</compile_context>

<pallas_src>
import math

import jax
import jax.numpy as jnp
from jax.experimental import pallas as pl
from jax.experimental.pallas import tpu as pltpu

LATENT_DIM = 128
NUM_HEADS = 8
HEAD_DIM = LATENT_DIM // NUM_HEADS


def _round_up(n, m):
    return ((n + m - 1) // m) * m


def _attn_kernel(x_ref, wv_ref, bv_ref, wout_ref, bout_ref, o_ref):
    # seq_len == 1  =>  softmax weight == 1  =>  attention output == V.
    x = x_ref[...].astype(jnp.float32)                              # (bt, D)
    v = jnp.dot(x, wv_ref[...],
                preferred_element_type=jnp.float32) + bv_ref[...]   # (bt, D)
    out = jnp.dot(v, wout_ref[...],
                  preferred_element_type=jnp.float32) + bout_ref[...]
    o_ref[...] = out.astype(o_ref.dtype)


def featurewise_attention(x, in_proj_w, in_proj_b, out_proj_w, out_proj_b,
                          *, block_b=1024):
    """x: (B, D) float32. Weights follow PyTorch conventions:
       in_proj_w (3D, D), in_proj_b (3D,), out_proj_w (D, D), out_proj_b (D,).

    block_b: target batch tile.  Defaults to 1024 which keeps the double-
    buffered f32 x/out tiles (~2 MiB total) well within VMEM on v5e/v6e and
    within v7x's smaller 64 MiB VMEM, while giving the MXU full 128-row passes
    and amortizing per-grid-step overhead.
    """
    B, D = x.shape
    assert D == LATENT_DIM

    # Only the V rows of the fused in-projection are needed (see header).
    w_v = in_proj_w[2 * D:3 * D, :]              # (D, D)
    b_v = in_proj_b[2 * D:3 * D]                 # (D,)

    # Pre-transpose so the kernel does plain x @ W (lane-dense outputs).
    w_v_t = jnp.transpose(w_v)                   # (D, D)
    w_out_t = jnp.transpose(out_proj_w)          # (D, D)
    b_v_row = b_v.reshape(1, D)
    b_out_row = out_proj_b.reshape(1, D)

    # Batch tile: sublane-aligned, lane-dense (last dim D=128).  Pad the batch
    # to a multiple of the tile instead of asserting divisibility.
    bt = max(8, min(block_b, _round_up(B, 8)))
    padded_b = _round_up(B, bt)
    x_in = jnp.pad(x, ((0, padded_b - B), (0, 0))) if padded_b != B else x
    grid = (padded_b // bt,)

    # Weights/biases use constant index maps -> resident in VMEM, not
    # re-DMA'd per grid step.
    resident = lambda shape: pl.BlockSpec(shape, lambda i: (0,) * len(shape))

    out = pl.pallas_call(
        _attn_kernel,
        out_shape=jax.ShapeDtypeStruct((padded_b, D), x.dtype),
        grid_spec=pltpu.PrefetchScalarGridSpec(
            num_scalar_prefetch=0,
            grid=grid,
            in_specs=[
                pl.BlockSpec((bt, D), lambda i: (i, 0)),   # x tile
                resident((D, D)),                          # W_v^T
                resident((1, D)),                          # b_v
                resident((D, D)),                          # W_out^T
                resident((1, D)),                          # b_out
            ],
            out_specs=pl.BlockSpec((bt, D), lambda i: (i, 0)),
        ),
        compiler_params=pltpu.CompilerParams(
            dimension_semantics=("parallel",)),
    )(x_in, w_v_t, b_v_row, w_out_t, b_out_row)

    return out[:B] if padded_b != B else out


def _reference(x, in_proj_w, in_proj_b, out_proj_w, out_proj_b):
    # Plain-JAX replica of nn.MultiheadAttention self-attention with seq_len=1.
    qkv = x @ in_proj_w.T + in_proj_b
    D = LATENT_DIM
    q, k, v = qkv[:, :D], qkv[:, D:2 * D], qkv[:, 2 * D:]
    B = x.shape[0]
    qh = q.reshape(B, NUM_HEADS, HEAD_DIM)
    kh = k.reshape(B, NUM_HEADS, HEAD_DIM)
    vh = v.reshape(B, NUM_HEADS, HEAD_DIM)
    scores = jnp.sum(qh * kh, axis=-1) / math.sqrt(HEAD_DIM)    # (B, H)
    w = jax.nn.softmax(scores[..., None], axis=-1)              # (B, H, 1) == 1
    attn = (w * vh).reshape(B, D)
    return attn @ out_proj_w.T + out_proj_b


if __name__ == "__main__":
    key = jax.random.PRNGKey(0)
    kx, k1, k2, k3, k4 = jax.random.split(key, 5)

    # Deterministic synthetic parameters (PyTorch-shaped):
    #   in_proj_weight: (3*D, D), in_proj_bias: (3*D,)
    #   out_proj.weight: (D, D),  out_proj.bias: (D,)
    bound_in = math.sqrt(6.0 / (LATENT_DIM + LATENT_DIM))       # xavier-uniform-like
    in_proj_w = jax.random.uniform(k1, (3 * LATENT_DIM, LATENT_DIM),
                                   minval=-bound_in, maxval=bound_in,
                                   dtype=jnp.float32)
    in_proj_b = jax.random.normal(k2, (3 * LATENT_DIM,), dtype=jnp.float32) * 0.02
    out_proj_w = jax.random.uniform(k3, (LATENT_DIM, LATENT_DIM),
                                    minval=-bound_in, maxval=bound_in,
                                    dtype=jnp.float32)
    out_proj_b = jax.random.normal(k4, (LATENT_DIM,), dtype=jnp.float32) * 0.02

    # Case 1: small aligned batch.
    B = 8
    x = jax.random.normal(kx, (B, LATENT_DIM), dtype=jnp.float32)
    out = featurewise_attention(x, in_proj_w, in_proj_b, out_proj_w, out_proj_b)
    out = jax.block_until_ready(out)
    ref = _reference(x, in_proj_w, in_proj_b, out_proj_w, out_proj_b)
    assert out.shape == (B, LATENT_DIM)
    assert jnp.allclose(out, ref, atol=1e-5, rtol=1e-5)

    # Case 2: batch not divisible by the tile (exercises the padding path).
    B2 = 12
    x2 = jax.random.normal(jax.random.PRNGKey(7), (B2, LATENT_DIM),
                           dtype=jnp.float32)
    out2 = featurewise_attention(x2, in_proj_w, in_proj_b,
                                 out_proj_w, out_proj_b)
    out2 = jax.block_until_ready(out2)
    ref2 = _reference(x2, in_proj_w, in_proj_b, out_proj_w, out_proj_b)
    assert out2.shape == (B2, LATENT_DIM)
    assert jnp.allclose(out2, ref2, atol=1e-5, rtol=1e-5)

    print("KERNEL_OK")
</pallas_src>

<mosaic_0001>
module attributes {stable_mosaic.version = 11 : i64} {
  func.func @_attn_kernel(%arg0: i32, %arg1: memref<8x128xf32, #tpu.memory_space<vmem>>, %arg2: memref<128x128xf32, #tpu.memory_space<vmem>>, %arg3: memref<1x128xf32, #tpu.memory_space<vmem>>, %arg4: memref<128x128xf32, #tpu.memory_space<vmem>>, %arg5: memref<1x128xf32, #tpu.memory_space<vmem>>, %arg6: memref<8x128xf32, #tpu.memory_space<vmem>>) attributes {dimension_semantics = [#tpu.dimension_semantics<parallel>], iteration_bounds = array<i64: 1>, scalar_prefetch = 0 : i64, scratch_operands = 0 : i64, tpu.core_type = #tpu.core_type<tc>, window_params = [{transform_indices = @transform_0, window_bounds = array<i64: 8, 128>}, {pipeline_mode = #tpu.pipeline_mode<synchronous>, transform_indices = @transform_1, window_bounds = array<i64: 128, 128>}, {pipeline_mode = #tpu.pipeline_mode<synchronous>, transform_indices = @transform_2, window_bounds = array<i64: 1, 128>}, {pipeline_mode = #tpu.pipeline_mode<synchronous>, transform_indices = @transform_3, window_bounds = array<i64: 128, 128>}, {pipeline_mode = #tpu.pipeline_mode<synchronous>, transform_indices = @transform_4, window_bounds = array<i64: 1, 128>}, {transform_indices = @transform_5, window_bounds = array<i64: 8, 128>}]} {
    %c0 = arith.constant 0 : index
    %c0_0 = arith.constant 0 : index
    %0 = vector.load %arg1[%c0, %c0_0] : memref<8x128xf32, #tpu.memory_space<vmem>>, vector<8x128xf32>
    %c0_1 = arith.constant 0 : index
    %c0_2 = arith.constant 0 : index
    %1 = vector.load %arg2[%c0_1, %c0_2] : memref<128x128xf32, #tpu.memory_space<vmem>>, vector<128x128xf32>
    %cst = arith.constant dense<0.000000e+00> : vector<8x128xf32>
    %2 = tpu.matmul %0, %1, %cst {dimension_numbers = #tpu.dot_dimension_numbers<[1], [0], [0], [1], [0, 0, 1, 1], [], []>} : vector<8x128xf32>, vector<128x128xf32>, vector<8x128xf32> -> vector<8x128xf32>
    %c0_3 = arith.constant 0 : index
    %c0_4 = arith.constant 0 : index
    %3 = vector.load %arg3[%c0_3, %c0_4] : memref<1x128xf32, #tpu.memory_space<vmem>>, vector<1x128xf32>
    %4 = vector.broadcast %3 : vector<1x128xf32> to vector<8x128xf32>
    %5 = arith.addf %2, %4 : vector<8x128xf32>
    %c0_5 = arith.constant 0 : index
    %c0_6 = arith.constant 0 : index
    %6 = vector.load %arg4[%c0_5, %c0_6] : memref<128x128xf32, #tpu.memory_space<vmem>>, vector<128x128xf32>
    %cst_7 = arith.constant dense<0.000000e+00> : vector<8x128xf32>
    %7 = tpu.matmul %5, %6, %cst_7 {dimension_numbers = #tpu.dot_dimension_numbers<[1], [0], [0], [1], [0, 0, 1, 1], [], []>} : vector<8x128xf32>, vector<128x128xf32>, vector<8x128xf32> -> vector<8x128xf32>
    %c0_8 = arith.constant 0 : index
    %c0_9 = arith.constant 0 : index
    %8 = vector.load %arg5[%c0_8, %c0_9] : memref<1x128xf32, #tpu.memory_space<vmem>>, vector<1x128xf32>
    %9 = vector.broadcast %8 : vector<1x128xf32> to vector<8x128xf32>
    %10 = arith.addf %7, %9 : vector<8x128xf32>
    %c0_10 = arith.constant 0 : index
    %c0_11 = arith.constant 0 : index
    %11 = vector.load %arg6[%c0_10, %c0_11] : memref<8x128xf32, #tpu.memory_space<vmem>>, vector<8x128xf32>
    tpu.vector_store %arg6[%c0_10, %c0_11], %10 {strides = array<i32>} : memref<8x128xf32, #tpu.memory_space<vmem>>, vector<8x128xf32>,
    return
  }
  func.func @transform_0(%arg0: i32) -> (i32, i32) {
    %c0_i32 = arith.constant 0 : i32
    %c0_i32_0 = arith.constant 0 : i32
    return %arg0, %c0_i32 : i32, i32
  }
  func.func @transform_1(%arg0: i32) -> (i32, i32) {
    %c0_i32 = arith.constant 0 : i32
    %c0_i32_0 = arith.constant 0 : i32
    %c0_i32_1 = arith.constant 0 : i32
    return %c0_i32, %c0_i32_0 : i32, i32
  }
  func.func @transform_2(%arg0: i32) -> (i32, i32) {
    %c0_i32 = arith.constant 0 : i32
    %c0_i32_0 = arith.constant 0 : i32
    %c0_i32_1 = arith.constant 0 : i32
    return %c0_i32, %c0_i32_0 : i32, i32
  }
  func.func @transform_3(%arg0: i32) -> (i32, i32) {
    %c0_i32 = arith.constant 0 : i32
    %c0_i32_0 = arith.constant 0 : i32
    %c0_i32_1 = arith.constant 0 : i32
    return %c0_i32, %c0_i32_0 : i32, i32
  }
  func.func @transform_4(%arg0: i32) -> (i32, i32) {
    %c0_i32 = arith.constant 0 : i32
    %c0_i32_0 = arith.constant 0 : i32
    %c0_i32_1 = arith.constant 0 : i32
    return %c0_i32, %c0_i32_0 : i32, i32
  }
  func.func @transform_5(%arg0: i32) -> (i32, i32) {
    %c0_i32 = arith.constant 0 : i32
    %c0_i32_0 = arith.constant 0 : i32
    return %arg0, %c0_i32 : i32, i32
  }
}

</mosaic_0001>

<llo_original>
// kernel: tpu_custom_call.1
$region0: #{tpu_custom_call.1}
  #allocation0 [shape = 'u32[]', space=smem, size = 0x4, offset = 0x4, fixed_abs, tag = 'smem constant byte address 0x4 - core index']
  #allocation1 [shape = 'u32[144,128]{1,0:T(1,128)}', space=vmem, size = 0x12000, scoped, tag = 'internal scratch']
  %s0 = inlined_call_operand.hbm [shape: f32[8,128], index: 0, kind: input, shape index: {}]
  %s1 = inlined_call_operand.hbm [shape: f32[128,128], index: 1, kind: input, shape index: {}]
  %s2 = inlined_call_operand.vmem [shape: f32[1,128], index: 2, kind: input, shape index: {}]
  %s3 = inlined_call_operand.hbm [shape: f32[128,128], index: 3, kind: input, shape index: {}]
  %s4 = inlined_call_operand.vmem [shape: f32[1,128], index: 4, kind: input, shape index: {}]
  %s5 = inlined_call_operand.hbm [shape: f32[8,128], index: 5, kind: output, shape index: {}]
  %s6 = sld [smem:[#allocation0]]
  $region42: #{tpu_custom_call.1} parent=0
    _
  %s8 = ssub.s32 1, %s6
  %s9 = scalar_select 0, %s8, %s6
  $region1: #{tpu_custom_call.1} parent=0
    #allocation2 [shape = 'u8[4096]{0}', space=vmem, size = 0x1000, scoped, tag = 'input window, operand 0, single buffered']
    #allocation3 [shape = 's32[1]{0}', space=sflag, size = 0x4, scoped, tag = 'scoped memory for tpu_custom_call.1']
    #allocation4 [shape = 's32[1]{0}', space=sflag, size = 0x4, scoped, tag = 'scoped memory for tpu_custom_call.1']
    #allocation5 [shape = 'u8[65536]{0}', space=vmem, size = 0x10000, scoped, tag = 'input window, operand 1, single buffered']
    #allocation6 [shape = 's32[1]{0}', space=sflag, size = 0x4, scoped, tag = 'scoped memory for tpu_custom_call.1']
    #allocation7 [shape = 'u8[65536]{0}', space=vmem, size = 0x10000, scoped, tag = 'input window, operand 3, single buffered']
    #allocation8 [shape = 'u8[4096]{0}', space=vmem, size = 0x1000, scoped, tag = 'output window, operand 0, single buffered']
    %10 = vsyncpa [#allocation3], 0
    %11 = vsyncpa [#allocation6], 0
    %12 = vsyncpa [#allocation4], 0
    // Predicated region
    $region2: #{tpu_custom_call.1} parent=1 // pred_check
      _
    $region3: #{tpu_custom_call.1} parent=1 // pred_check_branch
      %14 = sbr.rel (0) target = $region5
    $region4: #{tpu_custom_call.1} parent=1 // pred_region
      %s16 = ssub.s32 128, 128
      %17 = vsyncadd [#allocation3], %s16
      %s19 = sshll.u32 [#allocation2], 4
      %s20 = int_to_ptr.vmem [resolvable:$true] %s19
      %22 = dma.hbm_to_vmem [thread:$0]  %s0, 128, %s20, [#allocation3]
    $region5: #{tpu_custom_call.1} parent=1 // pred_fallthru
      _
    // Predicated region
    $region6: #{tpu_custom_call.1} parent=1 // pred_check
      _
    $region7: #{tpu_custom_call.1} parent=1 // pred_check_branch
      %24 = sbr.rel (0) target = $region9
    $region8: #{tpu_custom_call.1} parent=1 // pred_region
      %s26 = ssub.s32 2048, 2048
      %27 = vsyncadd [#allocation6], %s26
      %s28 = sshll.u32 [#allocation5], 4
      %s29 = int_to_ptr.vmem [resolvable:$true] %s28
      %34 = dma.hbm_to_vmem [thread:$0]  %s1, 2048, %s29, [#allocation6], 128, 128, 8
    $region9: #{tpu_custom_call.1} parent=1 // pred_fallthru
      _
    // Predicated region
    $region10: #{tpu_custom_call.1} parent=1 // pred_check
      _
    $region11: #{tpu_custom_call.1} parent=1 // pred_check_branch
      %36 = sbr.rel (0) target = $region13
    $region12: #{tpu_custom_call.1} parent=1 // pred_region
      _
    $region13: #{tpu_custom_call.1} parent=1 // pred_fallthru
      _
    // Predicated region
    $region14: #{tpu_custom_call.1} parent=1 // pred_check
      _
    $region15: #{tpu_custom_call.1} parent=1 // pred_check_branch
      %38 = sbr.rel (0) target = $region17
    $region16: #{tpu_custom_call.1} parent=1 // pred_region
      %s40 = ssub.s32 2048, 2048
      %41 = vsyncadd [#allocation6], %s40
      %s42 = sshll.u32 [#allocation7], 4
      %s43 = int_to_ptr.vmem [resolvable:$true] %s42
      %48 = dma.hbm_to_vmem [thread:$0]  %s3, 2048, %s43, [#allocation6], 128, 128, 8
    $region17: #{tpu_custom_call.1} parent=1 // pred_fallthru
      _
    // Predicated region
    $region18: #{tpu_custom_call.1} parent=1 // pred_check
      _
    $region19: #{tpu_custom_call.1} parent=1 // pred_check_branch
      %50 = sbr.rel (0) target = $region21
    $region20: #{tpu_custom_call.1} parent=1 // pred_region
      _
    $region21: #{tpu_custom_call.1} parent=1 // pred_fallthru
      _
    // Predicated region
    $region22: #{tpu_custom_call.1} parent=1 // pred_check
      _
    $region23: #{tpu_custom_call.1} parent=1 // pred_check_branch
      %52 = sbr.rel (0) target = $region25
    $region24: #{tpu_custom_call.1} parent=1 // pred_region
      %53 = dma.done [#allocation3], 128
    $region25: #{tpu_custom_call.1} parent=1 // pred_fallthru
      _
    // Predicated region
    $region26: #{tpu_custom_call.1} parent=1 // pred_check
      _
    $region27: #{tpu_custom_call.1} parent=1 // pred_check_branch
      %55 = sbr.rel (0) target = $region29
    $region28: #{tpu_custom_call.1} parent=1 // pred_region
      %56 = dma.done [#allocation6], 2048
    $region29: #{tpu_custom_call.1} parent=1 // pred_fallthru
      _
    // Predicated region
    $region30: #{tpu_custom_call.1} parent=1 // pred_check
      _
    $region31: #{tpu_custom_call.1} parent=1 // pred_check_branch
      %58 = sbr.rel (0) target = $region33
    $region32: #{tpu_custom_call.1} parent=1 // pred_region
      %59 = dma.done [#allocation6], 2048
    $region33: #{tpu_custom_call.1} parent=1 // pred_fallthru
      _
    %v60 = vld [vmem:[#allocation2] sm:$0xff]
    %v61 = vld [vmem:[#allocation5] sm:$0xff]
    %v62 = vld [vmem:[#allocation5 + $0x8] sm:$0xff]
    %v63 = vld [vmem:[#allocation5 + $0x10] sm:$0xff]
    %v64 = vld [vmem:[#allocation5 + $0x18] sm:$0xff]
    %v65 = vld [vmem:[#allocation5 + $0x20] sm:$0xff]
    %v66 = vld [vmem:[#allocation5 + $0x28] sm:$0xff]
    %v67 = vld [vmem:[#allocation5 + $0x30] sm:$0xff]
    %v68 = vld [vmem:[#allocation5 + $0x38] sm:$0xff]
    %v69 = vld [vmem:[#allocation5 + $0x40] sm:$0xff]
    %v70 = vld [vmem:[#allocation5 + $0x48] sm:$0xff]
    %v71 = vld [vmem:[#allocation5 + $0x50] sm:$0xff]
    %v72 = vld [vmem:[#allocation5 + $0x58] sm:$0xff]
    %v73 = vld [vmem:[#allocation5 + $0x60] sm:$0xff]
    %v74 = vld [vmem:[#allocation5 + $0x68] sm:$0xff]
    %v75 = vld [vmem:[#allocation5 + $0x70] sm:$0xff]
    %v76 = vld [vmem:[#allocation5 + $0x78] sm:$0xff]
    %v77 = vld [vmem:[%s2] sm:$0x1]
    %v79 = vlaneseq
    %v80 = vshrl.u32 %v79, 7
    %v81 = vsub.s32 0, %v80
    %v82 = vrot.slane %v77, %v81
    %84 = vmatprep.subr.mxu0 0.0
    %85 = vmatpush1.msra.mxu0 %v76
    %86 = vmatprep.subr.mxu0 0.0
    %87 = vmatpush1.msra.mxu0 %v75
    %88 = vmatprep.subr.mxu0 0.0
    %89 = vmatpush1.msra.mxu0 %v74
    %90 = vmatprep.subr.mxu0 0.0
    %91 = vmatpush1.msra.mxu0 %v73
    %92 = vmatprep.subr.mxu0 0.0
    %93 = vmatpush1.msra.mxu0 %v72
    %94 = vmatprep.subr.mxu0 0.0
    %95 = vmatpush1.msra.mxu0 %v71
    %96 = vmatprep.subr.mxu0 0.0
    %97 = vmatpush1.msra.mxu0 %v70
    %98 = vmatprep.subr.mxu0 0.0
    %99 = vmatpush1.msra.mxu0 %v69
    %100 = vmatprep.subr.mxu0 0.0
    %101 = vmatpush1.msra.mxu0 %v68
    %102 = vmatprep.subr.mxu0 0.0
    %103 = vmatpush1.msra.mxu0 %v67
    %104 = vmatprep.subr.mxu0 0.0
    %105 = vmatpush1.msra.mxu0 %v66
    %106 = vmatprep.subr.mxu0 0.0
    %107 = vmatpush1.msra.mxu0 %v65
    %108 = vmatprep.subr.mxu0 0.0
    %109 = vmatpush1.msra.mxu0 %v64
    %110 = vmatprep.subr.mxu0 0.0
    %111 = vmatpush1.msra.mxu0 %v63
    %112 = vmatprep.subr.mxu0 0.0
    %113 = vmatpush1.msra.mxu0 %v62
    %114 = vmatprep.subr.mxu0 0.0
    %115 = vmatpush1.msra.mxu0 %v61
    %116 = vmatprep.subr.mxu0 0.0
    %117 = vmatpush2.msra.mxu0 0.0
    %118 = vmatprep.subr.mxu0 0.0
    %119 = vmatpush2.msra.mxu0 0.0
    %120 = vmatprep.subr.mxu0 0.0
    %121 = vmatpush2.msra.mxu0 0.0
    %122 = vmatprep.subr.mxu0 0.0
    %123 = vmatpush2.msra.mxu0 0.0
    %124 = vmatprep.subr.mxu0 0.0
    %125 = vmatpush2.msra.mxu0 0.0
    %126 = vmatprep.subr.mxu0 0.0
    %127 = vmatpush2.msra.mxu0 0.0
    %128 = vmatprep.subr.mxu0 0.0
    %129 = vmatpush2.msra.mxu0 0.0
    %130 = vmatprep.subr.mxu0 0.0
    %131 = vmatpush2.msra.mxu0 0.0
    %132 = vmatprep.subr.mxu0 0.0
    %133 = vmatpush2.msra.mxu0 0.0
    %134 = vmatprep.subr.mxu0 0.0
    %135 = vmatpush2.msra.mxu0 0.0
    %136 = vmatprep.subr.mxu0 0.0
    %137 = vmatpush2.msra.mxu0 0.0
    %138 = vmatprep.subr.mxu0 0.0
    %139 = vmatpush2.msra.mxu0 0.0
    %140 = vmatprep.subr.mxu0 0.0
    %141 = vmatpush2.msra.mxu0 0.0
    %142 = vmatprep.subr.mxu0 0.0
    %143 = vmatpush2.msra.mxu0 0.0
    %144 = vmatprep.subr.mxu0 0.0
    %145 = vmatpush2.msra.mxu0 0.0
    %146 = vmatprep.subr.mxu0 0.0
    %147 = vmatpush2.msra.mxu0 0.0
    %148 = vmatprep.mubr.f32.mxu0 0.0
    %149 = vmatmul.mubr.f32.gmra.mxu0 %v60
    %v150 = vpop.f32.mrf.mxu0
    %v151 = vadd.f32 %v82, %v150
    %v152 = vpop.f32.mrf.mxu0
    %153 = vdwg.mxu0
    %v154 = vld [vmem:[#allocation7] sm:$0xff]
    %v155 = vld [vmem:[#allocation7 + $0x8] sm:$0xff]
    %v156 = vld [vmem:[#allocation7 + $0x10] sm:$0xff]
    %v157 = vld [vmem:[#allocation7 + $0x18] sm:$0xff]
    %v158 = vld [vmem:[#allocation7 + $0x20] sm:$0xff]
    %v159 = vld [vmem:[#allocation7 + $0x28] sm:$0xff]
    %v160 = vld [vmem:[#allocation7 + $0x30] sm:$0xff]
    %v161 = vld [vmem:[#allocation7 + $0x38] sm:$0xff]
    %v162 = vld [vmem:[#allocation7 + $0x40] sm:$0xff]
    %v163 = vld [vmem:[#allocation7 + $0x48] sm:$0xff]
    %v164 = vld [vmem:[#allocation7 + $0x50] sm:$0xff]
    %v165 = vld [vmem:[#allocation7 + $0x58] sm:$0xff]
    %v166 = vld [vmem:[#allocation7 + $0x60] sm:$0xff]
    %v167 = vld [vmem:[#allocation7 + $0x68] sm:$0xff]
    %v168 = vld [vmem:[#allocation7 + $0x70] sm:$0xff]
    %v169 = vld [vmem:[#allocation7 + $0x78] sm:$0xff]
    %v170 = vld [vmem:[%s4] sm:$0x1]
    %v172 = vlaneseq
    %v173 = vshrl.u32 %v172, 7
    %v174 = vsub.s32 0, %v173
    %v175 = vrot.slane %v170, %v174
    %177 = vmatprep.subr.mxu0 0.0
    %178 = vmatpush1.msra.mxu0 %v169
    %179 = vmatprep.subr.mxu0 0.0
    %180 = vmatpush1.msra.mxu0 %v168
    %181 = vmatprep.subr.mxu0 0.0
    %182 = vmatpush1.msra.mxu0 %v167
    %183 = vmatprep.subr.mxu0 0.0
    %184 = vmatpush1.msra.mxu0 %v166
    %185 = vmatprep.subr.mxu0 0.0
    %186 = vmatpush1.msra.mxu0 %v165
    %187 = vmatprep.subr.mxu0 0.0
    %188 = vmatpush1.msra.mxu0 %v164
    %189 = vmatprep.subr.mxu0 0.0
    %190 = vmatpush1.msra.mxu0 %v163
    %191 = vmatprep.subr.mxu0 0.0
    %192 = vmatpush1.msra.mxu0 %v162
    %193 = vmatprep.subr.mxu0 0.0
    %194 = vmatpush1.msra.mxu0 %v161
    %195 = vmatprep.subr.mxu0 0.0
    %196 = vmatpush1.msra.mxu0 %v160
    %197 = vmatprep.subr.mxu0 0.0
    %198 = vmatpush1.msra.mxu0 %v159
    %199 = vmatprep.subr.mxu0 0.0
    %200 = vmatpush1.msra.mxu0 %v158
    %201 = vmatprep.subr.mxu0 0.0
    %202 = vmatpush1.msra.mxu0 %v157
    %203 = vmatprep.subr.mxu0 0.0
    %204 = vmatpush1.msra.mxu0 %v156
    %205 = vmatprep.subr.mxu0 0.0
    %206 = vmatpush1.msra.mxu0 %v155
    %207 = vmatprep.subr.mxu0 0.0
    %208 = vmatpush1.msra.mxu0 %v154
    %209 = vmatprep.subr.mxu0 0.0
    %210 = vmatpush2.msra.mxu0 0.0
    %211 = vmatprep.subr.mxu0 0.0
    %212 = vmatpush2.msra.mxu0 0.0
    %213 = vmatprep.subr.mxu0 0.0
    %214 = vmatpush2.msra.mxu0 0.0
    %215 = vmatprep.subr.mxu0 0.0
    %216 = vmatpush2.msra.mxu0 0.0
    %217 = vmatprep.subr.mxu0 0.0
    %218 = vmatpush2.msra.mxu0 0.0
    %219 = vmatprep.subr.mxu0 0.0
    %220 = vmatpush2.msra.mxu0 0.0
    %221 = vmatprep.subr.mxu0 0.0
    %222 = vmatpush2.msra.mxu0 0.0
    %223 = vmatprep.subr.mxu0 0.0
    %224 = vmatpush2.msra.mxu0 0.0
    %225 = vmatprep.subr.mxu0 0.0
    %226 = vmatpush2.msra.mxu0 0.0
    %227 = vmatprep.subr.mxu0 0.0
    %228 = vmatpush2.msra.mxu0 0.0
    %229 = vmatprep.subr.mxu0 0.0
    %230 = vmatpush2.msra.mxu0 0.0
    %231 = vmatprep.subr.mxu0 0.0
    %232 = vmatpush2.msra.mxu0 0.0
    %233 = vmatprep.subr.mxu0 0.0
    %234 = vmatpush2.msra.mxu0 0.0
    %235 = vmatprep.subr.mxu0 0.0
    %236 = vmatpush2.msra.mxu0 0.0
    %237 = vmatprep.subr.mxu0 0.0
    %238 = vmatpush2.msra.mxu0 0.0
    %239 = vmatprep.subr.mxu0 0.0
    %240 = vmatpush2.msra.mxu0 0.0
    %241 = vmatprep.mubr.f32.mxu0 0.0
    %242 = vmatmul.mubr.f32.gmra.mxu0 %v151
    %v243 = vpop.f32.mrf.mxu0
    %v244 = vadd.f32 %v175, %v243
    %v245 = vpop.f32.mrf.mxu0
    %246 = vdwg.mxu0
    %247 = vst [vmem:[#allocation8] sm:$0xff] %v244
    // Predicated region
    $region34: #{tpu_custom_call.1} parent=1 // pred_check
      _
    $region35: #{tpu_custom_call.1} parent=1 // pred_check_branch
      %249 = sbr.rel (0) target = $region37
    $region36: #{tpu_custom_call.1} parent=1 // pred_region
      %s251 = ssub.s32 128, 128
      %252 = vsyncadd [#allocation4], %s251
      %s254 = sshll.u32 [#allocation8], 4
      %s255 = int_to_ptr.vmem [resolvable:$true] %s254
      %257 = dma.vmem_to_hbm [thread:$0]  %s255, 128, %s5, [#allocation4]
    $region37: #{tpu_custom_call.1} parent=1 // pred_fallthru
      _
    // Predicated region
    $region38: #{tpu_custom_call.1} parent=1 // pred_check
      _
    $region39: #{tpu_custom_call.1} parent=1 // pred_check_branch
      %259 = sbr.rel (0) target = $region41
    $region40: #{tpu_custom_call.1} parent=1 // pred_region
      %260 = dma.done [#allocation4], 128
    $region41: #{tpu_custom_call.1} parent=1 // pred_fallthru
      _
    %261 = vsyncpa [#allocation3], 1
    %262 = vsyncpa [#allocation6], 1
    %263 = vsyncpa [#allocation4], 1

</llo_original>
